<compile_context>
chip_gen: v5e
topology: v5e:2x2
jax: 0.10.0
libtpu: 0.0.40
codegen_flags: <defaults>
</compile_context>

<pallas_src>
import functools

import jax
import jax.numpy as jnp
from jax import lax
from jax.experimental import pallas as pl
from jax.experimental.pallas import tpu as pltpu


# ----------------------------------------------------------------------------
# Kernels
# ----------------------------------------------------------------------------

def _rope_full_kernel(pos_ref, inv_ref, cos_ref, sin_ref, *, attention_scaling):
    """Plain path, full-width freqs (head_dim == 128 or any D with half % 128 != 0).

    pos_ref: (TILE, 1) int32    inv_ref: (1, D) f32 == [inv_freq, inv_freq]
    cos_ref / sin_ref: (TILE, D) out dtype
    """
    pos = pos_ref[...].astype(jnp.float32)                     # (TILE, 1)
    angles = pos * inv_ref[...]                                 # (TILE, D)
    c = jnp.cos(angles)
    s = jnp.sin(angles)
    if attention_scaling != 1.0:
        c = c * attention_scaling
        s = s * attention_scaling
    cos_ref[...] = c.astype(cos_ref.dtype)
    sin_ref[...] = s.astype(sin_ref.dtype)


def _rope_halfconcat_kernel(pos_ref, inv_ref, cos_ref, sin_ref, *, attention_scaling):
    """Plain path, half-width compute + duplicate-concat (half % 128 == 0, D >= 256).

    pos_ref: (TILE, 1) int32    inv_ref: (1, half) f32
    cos_ref / sin_ref: (TILE, 2*half) out dtype
    """
    pos = pos_ref[...].astype(jnp.float32)                      # (TILE, 1)
    freqs = pos * inv_ref[...]                                   # (TILE, half)
    c = jnp.cos(freqs)                                           # half the EUP work
    s = jnp.sin(freqs)
    if attention_scaling != 1.0:
        c = c * attention_scaling
        s = s * attention_scaling
    cos_ref[...] = jnp.concatenate([c, c], axis=-1).astype(cos_ref.dtype)
    sin_ref[...] = jnp.concatenate([s, s], axis=-1).astype(sin_ref.dtype)


def _rope_packed_matmul_kernel(pos_ref, expand_ref, cos_ref, sin_ref, *,
                               attention_scaling):
    """Packed lane-dense path, tokens_per_row >= 4 (head_dim <= 32).

    The token->lane expansion and the inv_freq multiply are fused into one
    f32 MXU matmul (the MXU is otherwise idle in this kernel):
      angles[r, l] = pos[r, l // D] * inv_pattern[l]  == (pos @ E)[r, l]
    with E[t, l] = inv_pattern[l] if l // D == t else 0.

    pos_ref: (TILE, T) int32    expand_ref: (T, 128) f32
    cos_ref / sin_ref: (TILE, 128) out dtype
    """
    pos = pos_ref[...].astype(jnp.float32)                       # (TILE, T)
    # Keep the contraction at full f32 precision: positions up to
    # max_position_embeddings do not fit a bf16 mantissa.
    angles = jnp.dot(pos, expand_ref[...],
                     precision=jax.lax.Precision.HIGHEST,
                     preferred_element_type=jnp.float32)         # (TILE, 128)
    c = jnp.cos(angles)
    s = jnp.sin(angles)
    if attention_scaling != 1.0:
        c = c * attention_scaling
        s = s * attention_scaling
    cos_ref[...] = c.astype(cos_ref.dtype)
    sin_ref[...] = s.astype(sin_ref.dtype)


def _rope_packed_select_kernel(pos_ref, invp_ref, cos_ref, sin_ref, *,
                               tokens_per_row, head_dim, attention_scaling):
    """Packed lane-dense path, tokens_per_row == 2 (head_dim == 64).

    pos_ref: (TILE, T) int32    invp_ref: (1, 128) f32 (tiled [inv,inv] pattern)
    cos_ref / sin_ref: (TILE, 128) out dtype
    """
    T = tokens_per_row
    D = head_dim
    tile_rows, L = cos_ref.shape

    pos = pos_ref[...].astype(jnp.float32)                       # (TILE, T)
    lane = lax.broadcasted_iota(jnp.int32, (1, L), 1)
    tok_of_lane = lane // D                                      # (1, L) in [0, T)

    # pos_wide[r, t*D + d] = pos[r, t]; T is tiny & static -> cheap VPU selects.
    pos_wide = jnp.zeros((tile_rows, L), jnp.float32)
    for t in range(T):
        pos_wide = jnp.where(tok_of_lane == t, pos[:, t:t + 1], pos_wide)

    angles = pos_wide * invp_ref[...]                            # (TILE, 128)
    c = jnp.cos(angles)
    s = jnp.sin(angles)
    if attention_scaling != 1.0:
        c = c * attention_scaling
        s = s * attention_scaling
    cos_ref[...] = c.astype(cos_ref.dtype)
    sin_ref[...] = s.astype(sin_ref.dtype)


# ----------------------------------------------------------------------------
# Wrapper
# ----------------------------------------------------------------------------

def _cdiv(a, b):
    return -(-a // b)


def _round_up(a, b):
    return _cdiv(a, b) * b


def llama_rotary_embedding(position_ids, inv_freq, attention_scaling, out_dtype,
                           *, tile_rows=2048):
    """Pallas equivalent of LlamaRotaryEmbedding.forward.

    position_ids: (B, S) integer array.
    inv_freq:     (head_dim // 2,) float32.
    Returns (cos, sin), each (B, S, head_dim) in `out_dtype`.
    """
    B, S = position_ids.shape
    half = int(inv_freq.shape[0])
    D = 2 * half
    N = B * S
    scale = float(attention_scaling)
    inv_freq = inv_freq.astype(jnp.float32)
    pos_flat = position_ids.reshape(N).astype(jnp.int32)

    # Lane-dense packed layout whenever head_dim divides 128.
    use_packed = (D < 128) and (128 % D == 0)

    if use_packed:
        T = 128 // D                      # tokens per 128-lane output row
        out_cols = 128
        # Pad so every output row is full (lane-dense stores) and the row count
        # is 16-sublane aligned; padding rows are sliced off after the call.
        NR = _round_up(_cdiv(N, T), 16)
        pad = NR * T - N
        if pad:
            pos_flat = jnp.pad(pos_flat, (0, pad))
        pos2d = pos_flat.reshape(NR, T)

        inv_pattern = jnp.tile(jnp.concatenate([inv_freq, inv_freq]), T)   # (128,)
        if T >= 4:
            # Fused expansion+scale matrix for the MXU path.
            tok_of_lane = jnp.arange(128, dtype=jnp.int32) // D            # (128,)
            expand = jnp.where(
                tok_of_lane[None, :] == jnp.arange(T, dtype=jnp.int32)[:, None],
                inv_pattern[None, :], 0.0).astype(jnp.float32)             # (T, 128)
            second = expand
            kernel = functools.partial(_rope_packed_matmul_kernel,
                                       attention_scaling=scale)
        else:
            second = inv_pattern.reshape(1, 128)
            kernel = functools.partial(_rope_packed_select_kernel,
                                       tokens_per_row=T, head_dim=D,
                                       attention_scaling=scale)
    else:
        T = 1
        out_cols = D
        NR = _round_up(N, 16)
        pad = NR - N
        if pad:
            pos_flat = jnp.pad(pos_flat, (0, pad))
        pos2d = pos_flat.reshape(NR, 1)

        if half % 128 == 0:
            # head_dim >= 256: half-width transcendentals genuinely save EUP work.
            second = inv_freq.reshape(1, half)
            kernel = functools.partial(_rope_halfconcat_kernel,
                                       attention_scaling=scale)
        else:
            # head_dim == 128 (or odd sizes): compute at full width, no concat.
            second = jnp.concatenate([inv_freq, inv_freq]).reshape(1, D)
            kernel = functools.partial(_rope_full_kernel,
                                       attention_scaling=scale)

    # Row tile: multiple of 16 (bf16 native sublane tiling), as large as
    # tile_rows to amortize per-step pipeline overhead, but keep >= 2 grid
    # steps when there is enough work so v7x's second TensorCore isn't idle.
    tile_rows = max(16, (tile_rows // 16) * 16)
    if NR > tile_rows:
        tile = tile_rows
    elif NR >= 32:
        tile = min(tile_rows, _round_up(_cdiv(NR, 2), 16))
    else:
        tile = NR
    grid = (pl.cdiv(NR, tile),)

    out_itemsize = jnp.dtype(out_dtype).itemsize
    cost = pl.CostEstimate(
        flops=6 * NR * out_cols,
        transcendentals=2 * NR * out_cols,
        bytes_accessed=(pos2d.size * 4 + second.size * 4
                        + 2 * NR * out_cols * out_itemsize),
    )

    cos, sin = pl.pallas_call(
        kernel,
        out_shape=(
            jax.ShapeDtypeStruct((NR, out_cols), out_dtype),
            jax.ShapeDtypeStruct((NR, out_cols), out_dtype),
        ),
        grid=grid,
        in_specs=[
            pl.BlockSpec((tile, pos2d.shape[1]), lambda i: (i, 0)),
            pl.BlockSpec(second.shape, lambda i: (0, 0)),
        ],
        out_specs=(
            pl.BlockSpec((tile, out_cols), lambda i: (i, 0)),
            pl.BlockSpec((tile, out_cols), lambda i: (i, 0)),
        ),
        compiler_params=pltpu.CompilerParams(
            dimension_semantics=("parallel",)),
        cost_estimate=cost,
    )(pos2d, second)

    cos = cos.reshape(NR * T, D)[:N].reshape(B, S, D)
    sin = sin.reshape(NR * T, D)[:N].reshape(B, S, D)
    return cos, sin


def default_rope_init(head_dim, rope_theta=10000.0):
    """ROPE_INIT_FUNCTIONS['default']: inv_freq + attention_scaling."""
    exponent = jnp.arange(0, head_dim, 2, dtype=jnp.float32) / head_dim
    inv_freq = 1.0 / (rope_theta ** exponent)          # (head_dim // 2,)
    attention_scaling = 1.0
    return inv_freq, attention_scaling


def _reference(position_ids, inv_freq, attention_scaling, out_dtype):
    """Plain-JAX mirror of the PyTorch forward math."""
    pos_f = position_ids.astype(jnp.float32)
    freqs = pos_f[:, :, None] * inv_freq.astype(jnp.float32)[None, None, :]
    emb = jnp.concatenate([freqs, freqs], axis=-1)
    cos = (jnp.cos(emb) * attention_scaling).astype(out_dtype)
    sin = (jnp.sin(emb) * attention_scaling).astype(out_dtype)
    return cos, sin


if __name__ == "__main__":
    key = jax.random.PRNGKey(0)
    x_dtype = jnp.bfloat16       # dtype of activations `x` (only its dtype matters)
    rope_theta = 10000.0

    # Cover all code paths with small shapes consistent with the module:
    #   head_dim=16  -> packed + MXU expansion   (hidden=32, heads=2)
    #   head_dim=64  -> packed + select loop
    #   head_dim=128 -> plain full-lane (common Llama case)
    #   head_dim=256 -> plain half-width + concat
    configs = [
        (2, 8, 16),
        (2, 8, 64),
        (2, 8, 128),
        (1, 8, 256),
    ]

    for batch, seq, head_dim in configs:
        key, sub = jax.random.split(key)
        position_ids = jax.random.randint(sub, (batch, seq), 0, 128,
                                          dtype=jnp.int32)
        inv_freq, attention_scaling = default_rope_init(head_dim, rope_theta)

        cos, sin = llama_rotary_embedding(position_ids, inv_freq,
                                          attention_scaling, x_dtype)
        jax.block_until_ready((cos, sin))

        cos_ref, sin_ref = _reference(position_ids, inv_freq,
                                      attention_scaling, x_dtype)

        assert cos.shape == (batch, seq, head_dim) and cos.dtype == x_dtype
        assert sin.shape == (batch, seq, head_dim) and sin.dtype == x_dtype
        assert jnp.allclose(cos.astype(jnp.float32), cos_ref.astype(jnp.float32),
                            atol=1e-2, rtol=1e-2), f"cos mismatch D={head_dim}"
        assert jnp.allclose(sin.astype(jnp.float32), sin_ref.astype(jnp.float32),
                            atol=1e-2, rtol=1e-2), f"sin mismatch D={head_dim}"

    print("KERNEL_OK")
</pallas_src>

<mosaic_0001>
module attributes {stable_mosaic.version = 11 : i64} {
  func.func @_rope_packed_matmul_kernel(%arg0: i32, %arg1: memref<16x8xi32, #tpu.memory_space<vmem>>, %arg2: memref<8x128xf32, #tpu.memory_space<vmem>>, %arg3: memref<16x128xbf16, #tpu.memory_space<vmem>>, %arg4: memref<16x128xbf16, #tpu.memory_space<vmem>>) attributes {dimension_semantics = [#tpu.dimension_semantics<parallel>], iteration_bounds = array<i64: 1>, scalar_prefetch = 0 : i64, scratch_operands = 0 : i64, tpu.core_type = #tpu.core_type<tc>, window_params = [{transform_indices = @transform_0, window_bounds = array<i64: 16, 8>}, {pipeline_mode = #tpu.pipeline_mode<synchronous>, transform_indices = @transform_1, window_bounds = array<i64: 8, 128>}, {transform_indices = @transform_2, window_bounds = array<i64: 16, 128>}, {transform_indices = @transform_3, window_bounds = array<i64: 16, 128>}]} {
    %c0 = arith.constant 0 : index
    %c0_0 = arith.constant 0 : index
    %0 = vector.load %arg1[%c0, %c0_0] : memref<16x8xi32, #tpu.memory_space<vmem>>, vector<16x8xi32>
    %1 = arith.sitofp %0 : vector<16x8xi32> to vector<16x8xf32>
    %c0_1 = arith.constant 0 : index
    %c0_2 = arith.constant 0 : index
    %2 = vector.load %arg2[%c0_1, %c0_2] : memref<8x128xf32, #tpu.memory_space<vmem>>, vector<8x128xf32>
    %cst = arith.constant dense<0.000000e+00> : vector<16x128xf32>
    %3 = tpu.matmul %1, %2, %cst {dimension_numbers = #tpu.dot_dimension_numbers<[1], [0], [0], [1], [0, 0, 1, 1], [], []>, precision = #tpu.contract_precision<fp32>} : vector<16x8xf32>, vector<8x128xf32>, vector<16x128xf32> -> vector<16x128xf32>
    %4 = math.cos %3 : vector<16x128xf32>
    %5 = math.sin %3 : vector<16x128xf32>
    %6 = arith.truncf %4 : vector<16x128xf32> to vector<16x128xbf16>
    %c0_3 = arith.constant 0 : index
    %c0_4 = arith.constant 0 : index
    %7 = vector.load %arg3[%c0_3, %c0_4] : memref<16x128xbf16, #tpu.memory_space<vmem>>, vector<16x128xbf16>
    tpu.vector_store %arg3[%c0_3, %c0_4], %6 {strides = array<i32>} : memref<16x128xbf16, #tpu.memory_space<vmem>>, vector<16x128xbf16>,
    %8 = arith.truncf %5 : vector<16x128xf32> to vector<16x128xbf16>
    %c0_5 = arith.constant 0 : index
    %c0_6 = arith.constant 0 : index
    %9 = vector.load %arg4[%c0_5, %c0_6] : memref<16x128xbf16, #tpu.memory_space<vmem>>, vector<16x128xbf16>
    tpu.vector_store %arg4[%c0_5, %c0_6], %8 {strides = array<i32>} : memref<16x128xbf16, #tpu.memory_space<vmem>>, vector<16x128xbf16>,
    return
  }
  func.func @transform_0(%arg0: i32) -> (i32, i32) {
    %c0_i32 = arith.constant 0 : i32
    %c0_i32_0 = arith.constant 0 : i32
    return %arg0, %c0_i32 : i32, i32
  }
  func.func @transform_1(%arg0: i32) -> (i32, i32) {
    %c0_i32 = arith.constant 0 : i32
    %c0_i32_0 = arith.constant 0 : i32
    %c0_i32_1 = arith.constant 0 : i32
    return %c0_i32, %c0_i32_0 : i32, i32
  }
  func.func @transform_2(%arg0: i32) -> (i32, i32) {
    %c0_i32 = arith.constant 0 : i32
    %c0_i32_0 = arith.constant 0 : i32
    return %arg0, %c0_i32 : i32, i32
  }
  func.func @transform_3(%arg0: i32) -> (i32, i32) {
    %c0_i32 = arith.constant 0 : i32
    %c0_i32_0 = arith.constant 0 : i32
    return %arg0, %c0_i32 : i32, i32
  }
}

</mosaic_0001>

<llo_original>
// kernel: tpu_custom_call.1
$region0: #{tpu_custom_call.1}
  #allocation0 [shape = 'u32[]', space=smem, size = 0x4, offset = 0x4, fixed_abs, tag = 'smem constant byte address 0x4 - core index']
  #allocation1 [shape = 'u32[72,128]{1,0:T(1,128)}', space=vmem, size = 0x9000, scoped, tag = 'internal scratch']
  %s0 = inlined_call_operand.vmem [shape: s32[16,8], index: 0, kind: input, shape index: {}]
  %s1 = inlined_call_operand.vmem [shape: f32[8,128], index: 1, kind: input, shape index: {}]
  %s2 = inlined_call_operand.hbm [shape: bf16[16,128], index: 2, kind: output, shape index: {0}]
  %s3 = inlined_call_operand.hbm [shape: bf16[16,128], index: 3, kind: output, shape index: {1}]
  %4 = xla_tuple %s2, %s3
  %s5 = sld [smem:[#allocation0]]
  $region26: #{tpu_custom_call.1} parent=0
    _
  %s7 = ssub.s32 1, %s5
  %s8 = scalar_select 0, %s7, %s5
  $region1: #{tpu_custom_call.1} parent=0
    #allocation2 [shape = 'u8[4096]{0}', space=vmem, size = 0x1000, scoped, tag = 'output window, operand 0, single buffered']
    #allocation3 [shape = 's32[1]{0}', space=sflag, size = 0x4, scoped, tag = 'scoped memory for tpu_custom_call.1']
    #allocation4 [shape = 'u8[4096]{0}', space=vmem, size = 0x1000, scoped, tag = 'output window, operand 1, single buffered']
    #allocation5 [shape = 's32[1]{0}', space=sflag, size = 0x4, scoped, tag = 'scoped memory for tpu_custom_call.1']
    %9 = vsyncpa [#allocation3], 0
    %10 = vsyncpa [#allocation5], 0
    // Predicated region
    $region2: #{tpu_custom_call.1} parent=1 // pred_check
      _
    $region3: #{tpu_custom_call.1} parent=1 // pred_check_branch
      %12 = sbr.rel (0) target = $region5
    $region4: #{tpu_custom_call.1} parent=1 // pred_region
      _
    $region5: #{tpu_custom_call.1} parent=1 // pred_fallthru
      _
    // Predicated region
    $region6: #{tpu_custom_call.1} parent=1 // pred_check
      _
    $region7: #{tpu_custom_call.1} parent=1 // pred_check_branch
      %14 = sbr.rel (0) target = $region9
    $region8: #{tpu_custom_call.1} parent=1 // pred_region
      _
    $region9: #{tpu_custom_call.1} parent=1 // pred_fallthru
      _
    %v15 = vld [vmem:[%s0] sm:$0xff]
    %v16 = vld [vmem:[%s0 + $0x8] sm:$0xff]
    %v17 = vcvt.s32.f32 %v15
    %v18 = vcvt.s32.f32 %v16
    %v19 = vld [vmem:[%s1] sm:$0xff]
    %vm20 = vcmask 64512
    %v22 = vsel %vm20, %v17, 0
    %v25 = vsel %vm20, %v18, 0
    %27 = vmatpush.msra.mxu0 0.0
    %28 = vmatpush.msra.mxu0 0.0
    %29 = vmatpush.msra.mxu0 0.0
    %30 = vmatpush.msra.mxu0 0.0
    %31 = vmatpush.msra.mxu0 0.0
    %32 = vmatpush.msra.mxu0 0.0
    %33 = vmatpush.msra.mxu0 0.0
    %34 = vmatpush.msra.mxu0 0.0
    %35 = vmatpush.msra.mxu0 0.0
    %36 = vmatpush.msra.mxu0 0.0
    %37 = vmatpush.msra.mxu0 0.0
    %38 = vmatpush.msra.mxu0 0.0
    %39 = vmatpush.msra.mxu0 0.0
    %40 = vmatpush.msra.mxu0 0.0
    %41 = vmatpush.msra.mxu0 0.0
    %v42 = vand.u32 %v19, 4294901760
    %43 = vmatpush.msra.mxu0 %v42
    %v44 = vand.u32 %v22, 4294901760
    %v45 = vsub.f32 %v22, %v44
    %v46 = vand.u32 %v45, 4294901760
    %v47 = vsub.f32 %v45, %v46
    %v48 = vand.u32 %v47, 4294901760
    %49 = vmatmul.f32.gmra.mxu0 %v48
    %v50 = vpop.f32.mrf.mxu0
    %v51 = vadd.f32 0.0, %v50
    %v52 = vand.u32 %v25, 4294901760
    %v53 = vsub.f32 %v25, %v52
    %v54 = vand.u32 %v53, 4294901760
    %v55 = vsub.f32 %v53, %v54
    %v56 = vand.u32 %v55, 4294901760
    %57 = vmatmul.f32.gmra.mxu0 %v56
    %v58 = vpop.f32.mrf.mxu0
    %v59 = vadd.f32 0.0, %v58
    %60 = vdwg.mxu0
    %61 = vmatpush.msra.mxu0 0.0
    %62 = vmatpush.msra.mxu0 0.0
    %63 = vmatpush.msra.mxu0 0.0
    %64 = vmatpush.msra.mxu0 0.0
    %65 = vmatpush.msra.mxu0 0.0
    %66 = vmatpush.msra.mxu0 0.0
    %67 = vmatpush.msra.mxu0 0.0
    %68 = vmatpush.msra.mxu0 0.0
    %69 = vmatpush.msra.mxu0 0.0
    %70 = vmatpush.msra.mxu0 0.0
    %71 = vmatpush.msra.mxu0 0.0
    %72 = vmatpush.msra.mxu0 0.0
    %73 = vmatpush.msra.mxu0 0.0
    %74 = vmatpush.msra.mxu0 0.0
    %75 = vmatpush.msra.mxu0 0.0
    %v76 = vand.u32 %v19, 4294901760
    %v77 = vsub.f32 %v19, %v76
    %v78 = vand.u32 %v77, 4294901760
    %v79 = vsub.f32 %v77, %v78
    %v80 = vand.u32 %v79, 4294901760
    %81 = vmatpush.msra.mxu0 %v80
    %v82 = vand.u32 %v22, 4294901760
    %83 = vmatmul.f32.gmra.mxu0 %v82
    %v84 = vpop.f32.mrf.mxu0
    %v85 = vadd.f32 %v51, %v84
    %v86 = vand.u32 %v25, 4294901760
    %87 = vmatmul.f32.gmra.mxu0 %v86
    %v88 = vpop.f32.mrf.mxu0
    %v89 = vadd.f32 %v59, %v88
    %90 = vdwg.mxu0
    %91 = vmatpush.msra.mxu0 0.0
    %92 = vmatpush.msra.mxu0 0.0
    %93 = vmatpush.msra.mxu0 0.0
    %94 = vmatpush.msra.mxu0 0.0
    %95 = vmatpush.msra.mxu0 0.0
    %96 = vmatpush.msra.mxu0 0.0
    %97 = vmatpush.msra.mxu0 0.0
    %98 = vmatpush.msra.mxu0 0.0
    %99 = vmatpush.msra.mxu0 0.0
    %100 = vmatpush.msra.mxu0 0.0
    %101 = vmatpush.msra.mxu0 0.0
    %102 = vmatpush.msra.mxu0 0.0
    %103 = vmatpush.msra.mxu0 0.0
    %104 = vmatpush.msra.mxu0 0.0
    %105 = vmatpush.msra.mxu0 0.0
    %v106 = vand.u32 %v19, 4294901760
    %v107 = vsub.f32 %v19, %v106
    %108 = vmatpush.msra.mxu0 %v107
    %v109 = vand.u32 %v22, 4294901760
    %v110 = vsub.f32 %v22, %v109
    %111 = vmatmul.f32.gmra.mxu0 %v110
    %v112 = vpop.f32.mrf.mxu0
    %v113 = vadd.f32 %v85, %v112
    %v114 = vand.u32 %v25, 4294901760
    %v115 = vsub.f32 %v25, %v114
    %116 = vmatmul.f32.gmra.mxu0 %v115
    %v117 = vpop.f32.mrf.mxu0
    %v118 = vadd.f32 %v89, %v117
    %119 = vdwg.mxu0
    %120 = vmatpush.msra.mxu0 0.0
    %121 = vmatpush.msra.mxu0 0.0
    %122 = vmatpush.msra.mxu0 0.0
    %123 = vmatpush.msra.mxu0 0.0
    %124 = vmatpush.msra.mxu0 0.0
    %125 = vmatpush.msra.mxu0 0.0
    %126 = vmatpush.msra.mxu0 0.0
    %127 = vmatpush.msra.mxu0 0.0
    %128 = vmatpush.msra.mxu0 0.0
    %129 = vmatpush.msra.mxu0 0.0
    %130 = vmatpush.msra.mxu0 0.0
    %131 = vmatpush.msra.mxu0 0.0
    %132 = vmatpush.msra.mxu0 0.0
    %133 = vmatpush.msra.mxu0 0.0
    %134 = vmatpush.msra.mxu0 0.0
    %v135 = vand.u32 %v19, 4294901760
    %136 = vmatpush.msra.mxu0 %v135
    %v137 = vand.u32 %v22, 4294901760
    %v138 = vsub.f32 %v22, %v137
    %v139 = vand.u32 %v138, 4294901760
    %140 = vmatmul.f32.gmra.mxu0 %v139
    %v141 = vpop.f32.mrf.mxu0
    %v142 = vadd.f32 %v113, %v141
    %v143 = vand.u32 %v25, 4294901760
    %v144 = vsub.f32 %v25, %v143
    %v145 = vand.u32 %v144, 4294901760
    %146 = vmatmul.f32.gmra.mxu0 %v145
    %v147 = vpop.f32.mrf.mxu0
    %v148 = vadd.f32 %v118, %v147
    %149 = vdwg.mxu0
    %150 = vmatpush.msra.mxu0 0.0
    %151 = vmatpush.msra.mxu0 0.0
    %152 = vmatpush.msra.mxu0 0.0
    %153 = vmatpush.msra.mxu0 0.0
    %154 = vmatpush.msra.mxu0 0.0
    %155 = vmatpush.msra.mxu0 0.0
    %156 = vmatpush.msra.mxu0 0.0
    %157 = vmatpush.msra.mxu0 0.0
    %158 = vmatpush.msra.mxu0 0.0
    %159 = vmatpush.msra.mxu0 0.0
    %160 = vmatpush.msra.mxu0 0.0
    %161 = vmatpush.msra.mxu0 0.0
    %162 = vmatpush.msra.mxu0 0.0
    %163 = vmatpush.msra.mxu0 0.0
    %164 = vmatpush.msra.mxu0 0.0
    %v165 = vand.u32 %v19, 4294901760
    %v166 = vsub.f32 %v19, %v165
    %v167 = vand.u32 %v166, 4294901760
    %168 = vmatpush.msra.mxu0 %v167
    %v169 = vand.u32 %v22, 4294901760
    %170 = vmatmul.f32.gmra.mxu0 %v169
    %v171 = vpop.f32.mrf.mxu0
    %v172 = vadd.f32 %v142, %v171
    %v173 = vand.u32 %v25, 4294901760
    %174 = vmatmul.f32.gmra.mxu0 %v173
    %v175 = vpop.f32.mrf.mxu0
    %v176 = vadd.f32 %v148, %v175
    %177 = vdwg.mxu0
    %178 = vmatpush.msra.mxu0 0.0
    %179 = vmatpush.msra.mxu0 0.0
    %180 = vmatpush.msra.mxu0 0.0
    %181 = vmatpush.msra.mxu0 0.0
    %182 = vmatpush.msra.mxu0 0.0
    %183 = vmatpush.msra.mxu0 0.0
    %184 = vmatpush.msra.mxu0 0.0
    %185 = vmatpush.msra.mxu0 0.0
    %186 = vmatpush.msra.mxu0 0.0
    %187 = vmatpush.msra.mxu0 0.0
    %188 = vmatpush.msra.mxu0 0.0
    %189 = vmatpush.msra.mxu0 0.0
    %190 = vmatpush.msra.mxu0 0.0
    %191 = vmatpush.msra.mxu0 0.0
    %192 = vmatpush.msra.mxu0 0.0
    %v193 = vand.u32 %v19, 4294901760
    %194 = vmatpush.msra.mxu0 %v193
    %v195 = vand.u32 %v22, 4294901760
    %196 = vmatmul.f32.gmra.mxu0 %v195
    %v197 = vpop.f32.mrf.mxu0
    %v198 = vadd.f32 %v172, %v197
    %v199 = vand.u32 %v25, 4294901760
    %200 = vmatmul.f32.gmra.mxu0 %v199
    %v201 = vpop.f32.mrf.mxu0
    %v202 = vadd.f32 %v176, %v201
    %203 = vdwg.mxu0
    %v204 = vand.u32 2147483647, %v198
    %vm205 = vcmp.le.f32.partialorder %v204, 0.7853982
    %vm206 = vcmp.lt.s32.totalorder %v198, 0
    %v207 = vand.u32 %v198, 2139095040
    %v208 = vshrl.u32 %v207, 23
    %v209 = vsub.s32 %v208, 127
    %v210 = vand.u32 2147483647, %v198
    %v211 = vand.u32 %v210, 8388607
    %v212 = vor.u32 %v211, 8388608
    %v213 = vsub.s32 0, %v212
    %v214 = vadd.s32 %v209, 1
    %vm215 = vcmp.gt.s32.totalorder %v214, 0
    %v216 = vsel %vm215, %v214, 0
    %v217 = vshrl.u32 %v216, 5
    %v218 = vand.u32 %v216, 31
    %v219 = vsub.s32 32, %v218
    %v220 = vshrl.u32 683565275, %v219
    %v221 = vshll.u32 683565275, %v218
    %v222 = vshrl.u32 2475754826, %v219
    %v223 = vor.u32 %v221, %v222
    %v224 = vshll.u32 2475754826, %v218
    %v225 = vshrl.u32 2131351028, %v219
    %v226 = vor.u32 %v224, %v225
    %v227 = vshll.u32 2131351028, %v218
    %v228 = vshrl.u32 2102212464, %v219
    %v229 = vor.u32 %v227, %v228
    %v230 = vshll.u32 2102212464, %v218
    %v231 = vshrl.u32 920167782, %v219
    %v232 = vor.u32 %v230, %v231
    %v233 = vshll.u32 920167782, %v218
    %v234 = vshrl.u32 1326507024, %v219
    %v235 = vor.u32 %v233, %v234
    %vm236 = vcmp.lt.s32.totalorder %v217, 1
    %vm237 = vcmp.lt.s32.totalorder %v217, 2
    %vm238 = vcmp.lt.s32.totalorder %v217, 3
    %vm239 = vcmp.lt.s32.totalorder %v217, 4
    %v240 = vsel %vm236, %v220, %v223
    %v241 = vsel %vm239, %v229, 2102212464
    %v242 = vsel %vm238, %v226, %v241
    %v243 = vsel %vm237, %v240, %v242
    %v244 = vsel %vm236, %v223, %v226
    %v245 = vsel %vm239, %v232, 920167782
    %v246 = vsel %vm238, %v229, %v245
    %v247 = vsel %vm237, %v244, %v246
    %v248 = vsel %vm236, %v226, %v229
    %v249 = vsel %vm239, %v235, 1326507024
    %v250 = vsel %vm238, %v232, %v249
    %v251 = vsel %vm237, %v248, %v250
    %v252 = vshll.u32 %v212, 8
    %v253 = vand.u32 %v252, 65535
    %v254 = vshrl.u32 %v252, 16
    %v255 = vand.u32 %v251, 65535
    %v256 = vshrl.u32 %v251, 16
    %v257 = vmul.u32 %v253, %v255
    %v258 = vmul.u32 %v253, %v256
    %v259 = vmul.u32 %v254, %v255
    %v260 = vmul.u32 %v254, %v256
    %v261 = vshll.u32 %v258, 16
    %v262 = vshrl.u32 %v258, 16
    %v263 = vshll.u32 %v259, 16
    %v264 = vshrl.u32 %v259, 16
    %vm265 = vc.u32 %v257, %v261
    %v266 = vsel %vm265, 1, 0
    %v267 = vadd.s32 %v257, %v261
    %v268 = vadd.s32 %v260, %v266
    %vm269 = vc.u32 %v267, %v263
    %v270 = vsel %vm269, 1, 0
    %v271 = vadd.s32 %v267, %v263
    %v272 = vadd.s32 %v268, %v270
    %v273 = vadd.s32 %v272, %v262
    %v274 = vadd.s32 %v273, %v264
    %v275 = vand.u32 %v252, 65535
    %v276 = vshrl.u32 %v252, 16
    %v277 = vand.u32 %v247, 65535
    %v278 = vshrl.u32 %v247, 16
    %v279 = vmul.u32 %v275, %v277
    %v280 = vmul.u32 %v275, %v278
    %v281 = vmul.u32 %v276, %v277
    %v282 = vmul.u32 %v276, %v278
    %v283 = vshll.u32 %v280, 16
    %v284 = vshrl.u32 %v280, 16
    %v285 = vshll.u32 %v281, 16
    %v286 = vshrl.u32 %v281, 16
    %vm287 = vc.u32 %v279, %v283
    %v288 = vsel %vm287, 1, 0
    %v289 = vadd.s32 %v279, %v283
    %v290 = vadd.s32 %v282, %v288
    %vm291 = vc.u32 %v289, %v285
    %v292 = vsel %vm291, 1, 0
    %v293 = vadd.s32 %v289, %v285
    %v294 = vadd.s32 %v290, %v292
    %v295 = vadd.s32 %v294, %v284
    %v296 = vadd.s32 %v295, %v286
    %v297 = vmul.u32 %v252, %v243
    %v298 = vadd.s32 %v274, %v293
    %vm299 = vc.u32 %v274, %v293
    %v300 = vadd.s32 %v296, 1
    %v301 = vsel %vm299, %v300, %v296
    %v302 = vadd.s32 %v297, %v301
    %v303 = vadd.s32 %v302, 536870912
    %v304 = vshrl.u32 %v303, 30
    %v305 = vshll.u32 %v304, 30
    %v306 = vsub.s32 %v302, %v305
    %vm307 = vcmp.lt.s32.totalorder %v306, 0
    %v308 = vsub.s32 0, %v306
    %v309 = vsel %vm307, %v308, %v306
    %v310 = vclz %v309
    %v311 = vsub.s32 %v310, 2
    %vm312 = vcmp.gt.s32.totalorder 0, %v311
    %v313 = vsel %vm312, 0, %v311
    %v314 = vsub.s32 32, %v313
    %v315 = vshll.u32 %v306, %v313
    %v316 = vshrl.u32 %v298, %v314
    %v317 = vor.u32 %v315, %v316
    %v318 = vsub.s32 4294967266, %v313
    %v319 = vadd.s32 %v318, 127
    %v320 = vshll.u32 %v319, 23
    %v321 = vor.u32 4788187, %v320
    %v322 = vand.u32 2147483647, %v321
    %v324 = vcvt.s32.f32 %v317
    %v325 = vmul.f32 %v324, %v322
    %v326 = vxor.u32 %v325, 2147483648
    %v327 = vsel %vm206, %v326, %v325
    %v328 = vsub.s32 4, %v304
    %v329 = vsel %vm206, %v328, %v304
    %v330 = vsel %vm205, %v198, %v327
    %v331 = vsel %vm205, 0, %v329
    %v332 = vmul.f32 %v330, %v330
    %v333 = vmul.f32 %v332, -0.001358992
    %v334 = vadd.f32 %v333, 0.041655596
    %v335 = vmul.f32 %v332, %v334
    %v336 = vadd.f32 %v335, -0.4999988
    %v337 = vmul.f32 %v332, %v336
    %v338 = vadd.f32 1.0, %v337
    %v339 = vmul.f32 %v330, %v330
    %v340 = vmul.f32 %v339, -0.00019511016
    %v341 = vadd.f32 %v340, 0.008332121
    %v342 = vmul.f32 %v339, %v341
    %v343 = vadd.f32 %v342, -0.16666654
    %v344 = vmul.f32 %v339, %v343
    %v345 = vadd.f32 %v344, 1.0
    %v346 = vmul.f32 %v345, %v330
    %vm347 = vweird.f32 %v198
    %v348 = vand.u32 %v331, 3
    %vm349 = vcmp.lt.s32.totalorder %v348, 2
    %vm350 = vcmp.eq.s32.totalorder %v348, 0
    %v351 = vxor.u32 %v346, 2147483648
    %v352 = vsel %vm350, %v338, %v351
    %vm353 = vcmp.eq.s32.totalorder %v348, 2
    %v354 = vxor.u32 %v338, 2147483648
    %v355 = vsel %vm353, %v354, %v346
    %v356 = vsel %vm349, %v352, %v355
    %v357 = vsel %vm347, nan, %v356
    %v358 = vand.u32 2147483647, %v202
    %vm359 = vcmp.le.f32.partialorder %v358, 0.7853982
    %vm360 = vcmp.lt.s32.totalorder %v202, 0
    %v361 = vand.u32 %v202, 2139095040
    %v362 = vshrl.u32 %v361, 23
    %v363 = vsub.s32 %v362, 127
    %v364 = vand.u32 2147483647, %v202
    %v365 = vand.u32 %v364, 8388607
    %v366 = vor.u32 %v365, 8388608
    %v367 = vsub.s32 0, %v366
    %v368 = vadd.s32 %v363, 1
    %vm369 = vcmp.gt.s32.totalorder %v368, 0
    %v370 = vsel %vm369, %v368, 0
    %v371 = vshrl.u32 %v370, 5
    %v372 = vand.u32 %v370, 31
    %v373 = vsub.s32 32, %v372
    %v374 = vshrl.u32 683565275, %v373
    %v375 = vshll.u32 683565275, %v372
    %v376 = vshrl.u32 2475754826, %v373
    %v377 = vor.u32 %v375, %v376
    %v378 = vshll.u32 2475754826, %v372
    %v379 = vshrl.u32 2131351028, %v373
    %v380 = vor.u32 %v378, %v379
    %v381 = vshll.u32 2131351028, %v372
    %v382 = vshrl.u32 2102212464, %v373
    %v383 = vor.u32 %v381, %v382
    %v384 = vshll.u32 2102212464, %v372
    %v385 = vshrl.u32 920167782, %v373
    %v386 = vor.u32 %v384, %v385
    %v387 = vshll.u32 920167782, %v372
    %v388 = vshrl.u32 1326507024, %v373
    %v389 = vor.u32 %v387, %v388
    %vm390 = vcmp.lt.s32.totalorder %v371, 1
    %vm391 = vcmp.lt.s32.totalorder %v371, 2
    %vm392 = vcmp.lt.s32.totalorder %v371, 3
    %vm393 = vcmp.lt.s32.totalorder %v371, 4
    %v394 = vsel %vm390, %v374, %v377
    %v395 = vsel %vm393, %v383, 2102212464
    %v396 = vsel %vm392, %v380, %v395
    %v397 = vsel %vm391, %v394, %v396
    %v398 = vsel %vm390, %v377, %v380
    %v399 = vsel %vm393, %v386, 920167782
    %v400 = vsel %vm392, %v383, %v399
    %v401 = vsel %vm391, %v398, %v400
    %v402 = vsel %vm390, %v380, %v383
    %v403 = vsel %vm393, %v389, 1326507024
    %v404 = vsel %vm392, %v386, %v403
    %v405 = vsel %vm391, %v402, %v404
    %v406 = vshll.u32 %v366, 8
    %v407 = vand.u32 %v406, 65535
    %v408 = vshrl.u32 %v406, 16
    %v409 = vand.u32 %v405, 65535
    %v410 = vshrl.u32 %v405, 16
    %v411 = vmul.u32 %v407, %v409
    %v412 = vmul.u32 %v407, %v410
    %v413 = vmul.u32 %v408, %v409
    %v414 = vmul.u32 %v408, %v410
    %v415 = vshll.u32 %v412, 16
    %v416 = vshrl.u32 %v412, 16
    %v417 = vshll.u32 %v413, 16
    %v418 = vshrl.u32 %v413, 16
    %vm419 = vc.u32 %v411, %v415
    %v420 = vsel %vm419, 1, 0
    %v421 = vadd.s32 %v411, %v415
    %v422 = vadd.s32 %v414, %v420
    %vm423 = vc.u32 %v421, %v417
    %v424 = vsel %vm423, 1, 0
    %v425 = vadd.s32 %v421, %v417
    %v426 = vadd.s32 %v422, %v424
    %v427 = vadd.s32 %v426, %v416
    %v428 = vadd.s32 %v427, %v418
    %v429 = vand.u32 %v406, 65535
    %v430 = vshrl.u32 %v406, 16
    %v431 = vand.u32 %v401, 65535
    %v432 = vshrl.u32 %v401, 16
    %v433 = vmul.u32 %v429, %v431
    %v434 = vmul.u32 %v429, %v432
    %v435 = vmul.u32 %v430, %v431
    %v436 = vmul.u32 %v430, %v432
    %v437 = vshll.u32 %v434, 16
    %v438 = vshrl.u32 %v434, 16
    %v439 = vshll.u32 %v435, 16
    %v440 = vshrl.u32 %v435, 16
    %vm441 = vc.u32 %v433, %v437
    %v442 = vsel %vm441, 1, 0
    %v443 = vadd.s32 %v433, %v437
    %v444 = vadd.s32 %v436, %v442
    %vm445 = vc.u32 %v443, %v439
    %v446 = vsel %vm445, 1, 0
    %v447 = vadd.s32 %v443, %v439
    %v448 = vadd.s32 %v444, %v446
    %v449 = vadd.s32 %v448, %v438
    %v450 = vadd.s32 %v449, %v440
    %v451 = vmul.u32 %v406, %v397
    %v452 = vadd.s32 %v428, %v447
    %vm453 = vc.u32 %v428, %v447
    %v454 = vadd.s32 %v450, 1
    %v455 = vsel %vm453, %v454, %v450
    %v456 = vadd.s32 %v451, %v455
    %v457 = vadd.s32 %v456, 536870912
    %v458 = vshrl.u32 %v457, 30
    %v459 = vshll.u32 %v458, 30
    %v460 = vsub.s32 %v456, %v459
    %vm461 = vcmp.lt.s32.totalorder %v460, 0
    %v462 = vsub.s32 0, %v460
    %v463 = vsel %vm461, %v462, %v460
    %v464 = vclz %v463
    %v465 = vsub.s32 %v464, 2
    %vm466 = vcmp.gt.s32.totalorder 0, %v465
    %v467 = vsel %vm466, 0, %v465
    %v468 = vsub.s32 32, %v467
    %v469 = vshll.u32 %v460, %v467
    %v470 = vshrl.u32 %v452, %v468
    %v471 = vor.u32 %v469, %v470
    %v472 = vsub.s32 4294967266, %v467
    %v473 = vadd.s32 %v472, 127
    %v474 = vshll.u32 %v473, 23
    %v475 = vor.u32 4788187, %v474
    %v476 = vand.u32 2147483647, %v475
    %v478 = vcvt.s32.f32 %v471
    %v479 = vmul.f32 %v478, %v476
    %v480 = vxor.u32 %v479, 2147483648
    %v481 = vsel %vm360, %v480, %v479
    %v482 = vsub.s32 4, %v458
    %v483 = vsel %vm360, %v482, %v458
    %v484 = vsel %vm359, %v202, %v481
    %v485 = vsel %vm359, 0, %v483
    %v486 = vmul.f32 %v484, %v484
    %v487 = vmul.f32 %v486, -0.001358992
    %v488 = vadd.f32 %v487, 0.041655596
    %v489 = vmul.f32 %v486, %v488
    %v490 = vadd.f32 %v489, -0.4999988
    %v491 = vmul.f32 %v486, %v490
    %v492 = vadd.f32 1.0, %v491
    %v493 = vmul.f32 %v484, %v484
    %v494 = vmul.f32 %v493, -0.00019511016
    %v495 = vadd.f32 %v494, 0.008332121
    %v496 = vmul.f32 %v493, %v495
    %v497 = vadd.f32 %v496, -0.16666654
    %v498 = vmul.f32 %v493, %v497
    %v499 = vadd.f32 %v498, 1.0
    %v500 = vmul.f32 %v499, %v484
    %vm501 = vweird.f32 %v202
    %v502 = vand.u32 %v485, 3
    %vm503 = vcmp.lt.s32.totalorder %v502, 2
    %vm504 = vcmp.eq.s32.totalorder %v502, 0
    %v505 = vxor.u32 %v500, 2147483648
    %v506 = vsel %vm504, %v492, %v505
    %vm507 = vcmp.eq.s32.totalorder %v502, 2
    %v508 = vxor.u32 %v492, 2147483648
    %v509 = vsel %vm507, %v508, %v500
    %v510 = vsel %vm503, %v506, %v509
    %v511 = vsel %vm501, nan, %v510
    %v512 = vand.u32 2147483647, %v198
    %vm513 = vcmp.le.f32.partialorder %v512, 0.7853982
    %vm514 = vcmp.lt.s32.totalorder %v198, 0
    %v515 = vand.u32 %v198, 2139095040
    %v516 = vshrl.u32 %v515, 23
    %v517 = vsub.s32 %v516, 127
    %v518 = vand.u32 2147483647, %v198
    %v519 = vand.u32 %v518, 8388607
    %v520 = vor.u32 %v519, 8388608
    %v521 = vsub.s32 0, %v520
    %v522 = vadd.s32 %v517, 1
    %vm523 = vcmp.gt.s32.totalorder %v522, 0
    %v524 = vsel %vm523, %v522, 0
    %v525 = vshrl.u32 %v524, 5
    %v526 = vand.u32 %v524, 31
    %v527 = vsub.s32 32, %v526
    %v528 = vshrl.u32 683565275, %v527
    %v529 = vshll.u32 683565275, %v526
    %v530 = vshrl.u32 2475754826, %v527
    %v531 = vor.u32 %v529, %v530
    %v532 = vshll.u32 2475754826, %v526
    %v533 = vshrl.u32 2131351028, %v527
    %v534 = vor.u32 %v532, %v533
    %v535 = vshll.u32 2131351028, %v526
    %v536 = vshrl.u32 2102212464, %v527
    %v537 = vor.u32 %v535, %v536
    %v538 = vshll.u32 2102212464, %v526
    %v539 = vshrl.u32 920167782, %v527
    %v540 = vor.u32 %v538, %v539
    %v541 = vshll.u32 920167782, %v526
    %v542 = vshrl.u32 1326507024, %v527
    %v543 = vor.u32 %v541, %v542
    %vm544 = vcmp.lt.s32.totalorder %v525, 1
    %vm545 = vcmp.lt.s32.totalorder %v525, 2
    %vm546 = vcmp.lt.s32.totalorder %v525, 3
    %vm547 = vcmp.lt.s32.totalorder %v525, 4
    %v548 = vsel %vm544, %v528, %v531
    %v549 = vsel %vm547, %v537, 2102212464
    %v550 = vsel %vm546, %v534, %v549
    %v551 = vsel %vm545, %v548, %v550
    %v552 = vsel %vm544, %v531, %v534
    %v553 = vsel %vm547, %v540, 920167782
    %v554 = vsel %vm546, %v537, %v553
    %v555 = vsel %vm545, %v552, %v554
    %v556 = vsel %vm544, %v534, %v537
    %v557 = vsel %vm547, %v543, 1326507024
    %v558 = vsel %vm546, %v540, %v557
    %v559 = vsel %vm545, %v556, %v558
    %v560 = vshll.u32 %v520, 8
    %v561 = vand.u32 %v560, 65535
    %v562 = vshrl.u32 %v560, 16
    %v563 = vand.u32 %v559, 65535
    %v564 = vshrl.u32 %v559, 16
    %v565 = vmul.u32 %v561, %v563
    %v566 = vmul.u32 %v561, %v564
    %v567 = vmul.u32 %v562, %v563
    %v568 = vmul.u32 %v562, %v564
    %v569 = vshll.u32 %v566, 16
    %v570 = vshrl.u32 %v566, 16
    %v571 = vshll.u32 %v567, 16
    %v572 = vshrl.u32 %v567, 16
    %vm573 = vc.u32 %v565, %v569
    %v574 = vsel %vm573, 1, 0
    %v575 = vadd.s32 %v565, %v569
    %v576 = vadd.s32 %v568, %v574
    %vm577 = vc.u32 %v575, %v571
    %v578 = vsel %vm577, 1, 0
    %v579 = vadd.s32 %v575, %v571
    %v580 = vadd.s32 %v576, %v578
    %v581 = vadd.s32 %v580, %v570
    %v582 = vadd.s32 %v581, %v572
    %v583 = vand.u32 %v560, 65535
    %v584 = vshrl.u32 %v560, 16
    %v585 = vand.u32 %v555, 65535
    %v586 = vshrl.u32 %v555, 16
    %v587 = vmul.u32 %v583, %v585
    %v588 = vmul.u32 %v583, %v586
    %v589 = vmul.u32 %v584, %v585
    %v590 = vmul.u32 %v584, %v586
    %v591 = vshll.u32 %v588, 16
    %v592 = vshrl.u32 %v588, 16
    %v593 = vshll.u32 %v589, 16
    %v594 = vshrl.u32 %v589, 16
    %vm595 = vc.u32 %v587, %v591
    %v596 = vsel %vm595, 1, 0
    %v597 = vadd.s32 %v587, %v591
    %v598 = vadd.s32 %v590, %v596
    %vm599 = vc.u32 %v597, %v593
    %v600 = vsel %vm599, 1, 0
    %v601 = vadd.s32 %v597, %v593
    %v602 = vadd.s32 %v598, %v600
    %v603 = vadd.s32 %v602, %v592
    %v604 = vadd.s32 %v603, %v594
    %v605 = vmul.u32 %v560, %v551
    %v606 = vadd.s32 %v582, %v601
    %vm607 = vc.u32 %v582, %v601
    %v608 = vadd.s32 %v604, 1
    %v609 = vsel %vm607, %v608, %v604
    %v610 = vadd.s32 %v605, %v609
    %v611 = vadd.s32 %v610, 536870912
    %v612 = vshrl.u32 %v611, 30
    %v613 = vshll.u32 %v612, 30
    %v614 = vsub.s32 %v610, %v613
    %vm615 = vcmp.lt.s32.totalorder %v614, 0
    %v616 = vsub.s32 0, %v614
    %v617 = vsel %vm615, %v616, %v614
    %v618 = vclz %v617
    %v619 = vsub.s32 %v618, 2
    %vm620 = vcmp.gt.s32.totalorder 0, %v619
    %v621 = vsel %vm620, 0, %v619
    %v622 = vsub.s32 32, %v621
    %v623 = vshll.u32 %v614, %v621
    %v624 = vshrl.u32 %v606, %v622
    %v625 = vor.u32 %v623, %v624
    %v626 = vsub.s32 4294967266, %v621
    %v627 = vadd.s32 %v626, 127
    %v628 = vshll.u32 %v627, 23
    %v629 = vor.u32 4788187, %v628
    %v630 = vand.u32 2147483647, %v629
    %v632 = vcvt.s32.f32 %v625
    %v633 = vmul.f32 %v632, %v630
    %v634 = vxor.u32 %v633, 2147483648
    %v635 = vsel %vm514, %v634, %v633
    %v636 = vsub.s32 4, %v612
    %v637 = vsel %vm514, %v636, %v612
    %v638 = vsel %vm513, %v198, %v635
    %v639 = vsel %vm513, 0, %v637
    %v640 = vmul.f32 %v638, %v638
    %v641 = vmul.f32 %v640, -0.001358992
    %v642 = vadd.f32 %v641, 0.041655596
    %v643 = vmul.f32 %v640, %v642
    %v644 = vadd.f32 %v643, -0.4999988
    %v645 = vmul.f32 %v640, %v644
    %v646 = vadd.f32 1.0, %v645
    %v647 = vmul.f32 %v638, %v638
    %v648 = vmul.f32 %v647, -0.00019511016
    %v649 = vadd.f32 %v648, 0.008332121
    %v650 = vmul.f32 %v647, %v649
    %v651 = vadd.f32 %v650, -0.16666654
    %v652 = vmul.f32 %v647, %v651
    %v653 = vadd.f32 %v652, 1.0
    %v654 = vmul.f32 %v653, %v638
    %vm655 = vweird.f32 %v198
    %v656 = vadd.s32 %v639, 3
    %v657 = vand.u32 %v656, 3
    %vm658 = vcmp.lt.s32.totalorder %v657, 2
    %vm659 = vcmp.eq.s32.totalorder %v657, 0
    %v660 = vxor.u32 %v654, 2147483648
    %v661 = vsel %vm659, %v646, %v660
    %vm662 = vcmp.eq.s32.totalorder %v657, 2
    %v663 = vxor.u32 %v646, 2147483648
    %v664 = vsel %vm662, %v663, %v654
    %v665 = vsel %vm658, %v661, %v664
    %v666 = vsel %vm655, nan, %v665
    %v667 = vand.u32 2147483647, %v202
    %vm668 = vcmp.le.f32.partialorder %v667, 0.7853982
    %vm669 = vcmp.lt.s32.totalorder %v202, 0
    %v670 = vand.u32 %v202, 2139095040
    %v671 = vshrl.u32 %v670, 23
    %v672 = vsub.s32 %v671, 127
    %v673 = vand.u32 2147483647, %v202
    %v674 = vand.u32 %v673, 8388607
    %v675 = vor.u32 %v674, 8388608
    %v676 = vsub.s32 0, %v675
    %v677 = vadd.s32 %v672, 1
    %vm678 = vcmp.gt.s32.totalorder %v677, 0
    %v679 = vsel %vm678, %v677, 0
    %v680 = vshrl.u32 %v679, 5
    %v681 = vand.u32 %v679, 31
    %v682 = vsub.s32 32, %v681
    %v683 = vshrl.u32 683565275, %v682
    %v684 = vshll.u32 683565275, %v681
    %v685 = vshrl.u32 2475754826, %v682
    %v686 = vor.u32 %v684, %v685
    %v687 = vshll.u32 2475754826, %v681
    %v688 = vshrl.u32 2131351028, %v682
    %v689 = vor.u32 %v687, %v688
    %v690 = vshll.u32 2131351028, %v681
    %v691 = vshrl.u32 2102212464, %v682
    %v692 = vor.u32 %v690, %v691
    %v693 = vshll.u32 2102212464, %v681
    %v694 = vshrl.u32 920167782, %v682
    %v695 = vor.u32 %v693, %v694
    %v696 = vshll.u32 920167782, %v681
    %v697 = vshrl.u32 1326507024, %v682
    %v698 = vor.u32 %v696, %v697
    %vm699 = vcmp.lt.s32.totalorder %v680, 1
    %vm700 = vcmp.lt.s32.totalorder %v680, 2
    %vm701 = vcmp.lt.s32.totalorder %v680, 3
    %vm702 = vcmp.lt.s32.totalorder %v680, 4
    %v703 = vsel %vm699, %v683, %v686
    %v704 = vsel %vm702, %v692, 2102212464
    %v705 = vsel %vm701, %v689, %v704
    %v706 = vsel %vm700, %v703, %v705
    %v707 = vsel %vm699, %v686, %v689
    %v708 = vsel %vm702, %v695, 920167782
    %v709 = vsel %vm701, %v692, %v708
    %v710 = vsel %vm700, %v707, %v709
    %v711 = vsel %vm699, %v689, %v692
    %v712 = vsel %vm702, %v698, 1326507024
    %v713 = vsel %vm701, %v695, %v712
    %v714 = vsel %vm700, %v711, %v713
    %v715 = vshll.u32 %v675, 8
    %v716 = vand.u32 %v715, 65535
    %v717 = vshrl.u32 %v715, 16
    %v718 = vand.u32 %v714, 65535
    %v719 = vshrl.u32 %v714, 16
    %v720 = vmul.u32 %v716, %v718
    %v721 = vmul.u32 %v716, %v719
    %v722 = vmul.u32 %v717, %v718
    %v723 = vmul.u32 %v717, %v719
    %v724 = vshll.u32 %v721, 16
    %v725 = vshrl.u32 %v721, 16
    %v726 = vshll.u32 %v722, 16
    %v727 = vshrl.u32 %v722, 16
    %vm728 = vc.u32 %v720, %v724
    %v729 = vsel %vm728, 1, 0
    %v730 = vadd.s32 %v720, %v724
    %v731 = vadd.s32 %v723, %v729
    %vm732 = vc.u32 %v730, %v726
    %v733 = vsel %vm732, 1, 0
    %v734 = vadd.s32 %v730, %v726
    %v735 = vadd.s32 %v731, %v733
    %v736 = vadd.s32 %v735, %v725
    %v737 = vadd.s32 %v736, %v727
    %v738 = vand.u32 %v715, 65535
    %v739 = vshrl.u32 %v715, 16
    %v740 = vand.u32 %v710, 65535
    %v741 = vshrl.u32 %v710, 16
    %v742 = vmul.u32 %v738, %v740
    %v743 = vmul.u32 %v738, %v741
    %v744 = vmul.u32 %v739, %v740
    %v745 = vmul.u32 %v739, %v741
    %v746 = vshll.u32 %v743, 16
    %v747 = vshrl.u32 %v743, 16
    %v748 = vshll.u32 %v744, 16
    %v749 = vshrl.u32 %v744, 16
    %vm750 = vc.u32 %v742, %v746
    %v751 = vsel %vm750, 1, 0
    %v752 = vadd.s32 %v742, %v746
    %v753 = vadd.s32 %v745, %v751
    %vm754 = vc.u32 %v752, %v748
    %v755 = vsel %vm754, 1, 0
    %v756 = vadd.s32 %v752, %v748
    %v757 = vadd.s32 %v753, %v755
    %v758 = vadd.s32 %v757, %v747
    %v759 = vadd.s32 %v758, %v749
    %v760 = vmul.u32 %v715, %v706
    %v761 = vadd.s32 %v737, %v756
    %vm762 = vc.u32 %v737, %v756
    %v763 = vadd.s32 %v759, 1
    %v764 = vsel %vm762, %v763, %v759
    %v765 = vadd.s32 %v760, %v764
    %v766 = vadd.s32 %v765, 536870912
    %v767 = vshrl.u32 %v766, 30
    %v768 = vshll.u32 %v767, 30
    %v769 = vsub.s32 %v765, %v768
    %vm770 = vcmp.lt.s32.totalorder %v769, 0
    %v771 = vsub.s32 0, %v769
    %v772 = vsel %vm770, %v771, %v769
    %v773 = vclz %v772
    %v774 = vsub.s32 %v773, 2
    %vm775 = vcmp.gt.s32.totalorder 0, %v774
    %v776 = vsel %vm775, 0, %v774
    %v777 = vsub.s32 32, %v776
    %v778 = vshll.u32 %v769, %v776
    %v779 = vshrl.u32 %v761, %v777
    %v780 = vor.u32 %v778, %v779
    %v781 = vsub.s32 4294967266, %v776
    %v782 = vadd.s32 %v781, 127
    %v783 = vshll.u32 %v782, 23
    %v784 = vor.u32 4788187, %v783
    %v785 = vand.u32 2147483647, %v784
    %v787 = vcvt.s32.f32 %v780
    %v788 = vmul.f32 %v787, %v785
    %v789 = vxor.u32 %v788, 2147483648
    %v790 = vsel %vm669, %v789, %v788
    %v791 = vsub.s32 4, %v767
    %v792 = vsel %vm669, %v791, %v767
    %v793 = vsel %vm668, %v202, %v790
    %v794 = vsel %vm668, 0, %v792
    %v795 = vmul.f32 %v793, %v793
    %v796 = vmul.f32 %v795, -0.001358992
    %v797 = vadd.f32 %v796, 0.041655596
    %v798 = vmul.f32 %v795, %v797
    %v799 = vadd.f32 %v798, -0.4999988
    %v800 = vmul.f32 %v795, %v799
    %v801 = vadd.f32 1.0, %v800
    %v802 = vmul.f32 %v793, %v793
    %v803 = vmul.f32 %v802, -0.00019511016
    %v804 = vadd.f32 %v803, 0.008332121
    %v805 = vmul.f32 %v802, %v804
    %v806 = vadd.f32 %v805, -0.16666654
    %v807 = vmul.f32 %v802, %v806
    %v808 = vadd.f32 %v807, 1.0
    %v809 = vmul.f32 %v808, %v793
    %vm810 = vweird.f32 %v202
    %v811 = vadd.s32 %v794, 3
    %v812 = vand.u32 %v811, 3
    %vm813 = vcmp.lt.s32.totalorder %v812, 2
    %vm814 = vcmp.eq.s32.totalorder %v812, 0
    %v815 = vxor.u32 %v809, 2147483648
    %v816 = vsel %vm814, %v801, %v815
    %vm817 = vcmp.eq.s32.totalorder %v812, 2
    %v818 = vxor.u32 %v801, 2147483648
    %v819 = vsel %vm817, %v818, %v809
    %v820 = vsel %vm813, %v816, %v819
    %v821 = vsel %vm810, nan, %v820
    %v822 = vpack.c.bf16 %v357, %v357
    %v823 = vpack.c.bf16 %v511, %v511
    %824 = vst [vmem:[#allocation2] sm:$0xf] %v822
    %825 = vst [vmem:[#allocation2 + $0x4] sm:$0xf] %v823
    %v826 = vpack.c.bf16 %v666, %v666
    %v827 = vpack.c.bf16 %v821, %v821
    %828 = vst [vmem:[#allocation4] sm:$0xf] %v826
    %829 = vst [vmem:[#allocation4 + $0x4] sm:$0xf] %v827
    // Predicated region
    $region10: #{tpu_custom_call.1} parent=1 // pred_check
      _
    $region11: #{tpu_custom_call.1} parent=1 // pred_check_branch
      %831 = sbr.rel (0) target = $region13
    $region12: #{tpu_custom_call.1} parent=1 // pred_region
      %833 = vsyncadd [#allocation3], 0
      %s834 = sshll.u32 [#allocation2], 4
      %s835 = int_to_ptr.vmem [resolvable:$true] %s834
      %s836 = sshll.u32 %s2, 4
      %s837 = int_to_ptr.hbm [resolvable:$true] %s836
      %842 = dma.vmem_to_hbm [thread:$0]  %s835, 128, %s837, [#allocation3], 64, 64, 4
    $region13: #{tpu_custom_call.1} parent=1 // pred_fallthru
      _
    // Predicated region
    $region14: #{tpu_custom_call.1} parent=1 // pred_check
      _
    $region15: #{tpu_custom_call.1} parent=1 // pred_check_branch
      %844 = sbr.rel (0) target = $region17
    $region16: #{tpu_custom_call.1} parent=1 // pred_region
      %846 = vsyncadd [#allocation5], 0
      %s847 = sshll.u32 [#allocation4], 4
      %s848 = int_to_ptr.vmem [resolvable:$true] %s847
      %s849 = sshll.u32 %s3, 4
      %s850 = int_to_ptr.hbm [resolvable:$true] %s849
      %855 = dma.vmem_to_hbm [thread:$0]  %s848, 128, %s850, [#allocation5], 64, 64, 4
    $region17: #{tpu_custom_call.1} parent=1 // pred_fallthru
      _
    // Predicated region
    $region18: #{tpu_custom_call.1} parent=1 // pred_check
      _
    $region19: #{tpu_custom_call.1} parent=1 // pred_check_branch
      %857 = sbr.rel (0) target = $region21
    $region20: #{tpu_custom_call.1} parent=1 // pred_region
      %859 = dma.done [#allocation3], 128
    $region21: #{tpu_custom_call.1} parent=1 // pred_fallthru
      _
    // Predicated region
    $region22: #{tpu_custom_call.1} parent=1 // pred_check
      _
    $region23: #{tpu_custom_call.1} parent=1 // pred_check_branch
      %861 = sbr.rel (0) target = $region25
    $region24: #{tpu_custom_call.1} parent=1 // pred_region
      %863 = dma.done [#allocation5], 128
    $region25: #{tpu_custom_call.1} parent=1 // pred_fallthru
      _
    %864 = vsyncpa [#allocation3], 1
    %865 = vsyncpa [#allocation5], 1

</llo_original>
